<compile_context>
chip_gen: v6e
topology: v6e:2x2x1
jax: 0.10.0
libtpu: 0.0.40
codegen_flags: <defaults>
</compile_context>

<pallas_src>
import functools

import jax
import jax.numpy as jnp
from jax.experimental import pallas as pl
from jax.experimental.pallas import tpu as pltpu

_LANE = 128
_SUBLANE = 8
_VMEM_TILE_BUDGET = 24 * 1024 * 1024  # pipelined-tile budget, safe on v7x (64 MiB phys)


# --------------------------------------------------------------------------- #
# Kernels
# --------------------------------------------------------------------------- #
def _mlp_kernel_single_k(x_ref, w_ref, b_ref, o_ref):
    """Whole reduction fits in one block: dot -> bias -> tanh -> store.

    No f32 VMEM accumulator round-trip and no predicated regions — cheapest
    path for the small CLS-head shapes this layer normally sees.
    """
    x = x_ref[...].astype(w_ref.dtype)  # in-VMEM VPU cast (f32 -> bf16), ~free
    y = jnp.dot(x, w_ref[...], preferred_element_type=jnp.float32)
    o_ref[...] = jnp.tanh(y + b_ref[...]).astype(o_ref.dtype)


def _mlp_kernel_acc(x_ref, w_ref, b_ref, o_ref, acc_ref):
    """K-tiled path: f32 VMEM accumulator, reduction (k) is the LAST grid axis."""
    k = pl.program_id(2)

    @pl.when(k == 0)
    def _init():
        acc_ref[...] = jnp.zeros_like(acc_ref)

    x = x_ref[...].astype(w_ref.dtype)  # in-VMEM VPU cast (f32 -> bf16), ~free
    # W is stored pre-transposed [H_in, H_out] -> plain [m,k] x [k,n] matmul,
    # no per-K-step XLU transpose of the weight tile.
    acc_ref[...] += jnp.dot(x, w_ref[...], preferred_element_type=jnp.float32)

    @pl.when(k == pl.num_programs(2) - 1)
    def _finalize():
        o_ref[...] = jnp.tanh(acc_ref[...] + b_ref[...]).astype(o_ref.dtype)


# --------------------------------------------------------------------------- #
# Parameter preparation (ONE-TIME, at model-load — not per forward call)
# --------------------------------------------------------------------------- #
def prepare_mlp_params(weight, bias, *, param_dtype=jnp.bfloat16):
    """weight: PyTorch nn.Linear layout [H_out, H_in]; bias: [H_out].

    Persist W transposed ([H_in, H_out]) and in bf16 so the kernel contracts
    LHS-last vs RHS-first (no transpose anywhere) and the dominant HBM stream
    is halved.  Bias stays f32 for the f32 epilogue.
    """
    # TODO(synk): optional further win — int8 (v5e/v6e) / fp8 (v7x) weight quant.
    w_t = jnp.asarray(weight).T.astype(param_dtype)       # [H_in, H_out]
    b2 = jnp.asarray(bias).reshape(1, -1).astype(jnp.float32)
    return w_t, b2


# --------------------------------------------------------------------------- #
# Wrapper
# --------------------------------------------------------------------------- #
def _pick_tile(dim, cap, unit):
    """Largest multiple of `unit` dividing `dim`, <= cap; else the full dim."""
    if dim % unit != 0:
        return dim  # full-extent block is always legal
    t = min(cap, dim)
    t = max(unit, t - (t % unit))
    while dim % t != 0:
        t -= unit
    return t


@functools.partial(jax.jit, static_argnames=("max_tm", "max_tn", "max_tk"))
def mlp_layer(features, w_t, bias2, *, max_tm=512, max_tn=1024, max_tk=2048):
    """out = tanh(features @ W.T + b).

    features: [B, H_in] (native dtype; cast to bf16 inside the kernel).
    w_t:      [H_in, H_out] bf16  (from prepare_mlp_params).
    bias2:    [1, H_out] f32.
    """
    B, H_in = features.shape
    Hi2, H_out = w_t.shape
    assert Hi2 == H_in and bias2.shape == (1, H_out)
    out_dtype = features.dtype

    x = features
    Bp = B
    # Rare fallback: huge, non-8-aligned batch -> pad once so an 8-aligned M tile exists.
    # TODO(synk): replace with a cdiv grid + masked final store to avoid this copy.
    if B > max_tm and B % _SUBLANE != 0:
        x = jnp.pad(x, ((0, (-B) % _SUBLANE), (0, 0)))
        Bp = x.shape[0]

    x_isz = jnp.dtype(x.dtype).itemsize
    w_isz = jnp.dtype(w_t.dtype).itemsize
    o_isz = jnp.dtype(out_dtype).itemsize

    # --- tile selection -----------------------------------------------------
    # M: a single block whenever possible so W (the dominant HBM operand) is
    #    streamed from HBM exactly once per call.
    tm = Bp if Bp <= max_tm else _pick_tile(Bp, max_tm, _SUBLANE)
    tk = _pick_tile(H_in, max_tk, _LANE)
    tn = _pick_tile(H_out, max_tn, _LANE)

    # v7x megacore: keep >= 2 blocks on a parallel axis so both TCs get work.
    if (Bp // tm == 1 and H_out // tn == 1
            and H_out >= 2 * _LANE and H_out % (2 * _LANE) == 0):
        tn = _pick_tile(H_out, H_out // 2, _LANE)

    def _footprint(tm_, tn_, tk_):
        return (2 * tm_ * tk_ * x_isz        # x double-buffer (fed in native dtype)
                + 2 * tk_ * tn_ * w_isz      # W double-buffer (bf16)
                + tm_ * tn_ * 4              # f32 accumulator scratch
                + 2 * tm_ * tn_ * o_isz      # output double-buffer
                + 2 * tn_ * 4)               # bias double-buffer

    # Shrink K, then N, until the pipelined footprint fits the v7x budget.
    while (_footprint(tm, tn, tk) > _VMEM_TILE_BUDGET
           and tk > 4 * _LANE and H_in % (tk // 2) == 0):
        tk //= 2
    while (_footprint(tm, tn, tk) > _VMEM_TILE_BUDGET
           and tn > 2 * _LANE and H_out % (tn // 2) == 0):
        tn //= 2

    footprint = _footprint(tm, tn, tk)
    vmem_limit = int(min(max(2 * footprint, 32 * 1024 * 1024), 64 * 1024 * 1024))

    n_m, n_n, n_k = Bp // tm, H_out // tn, H_in // tk

    cost = pl.CostEstimate(
        flops=2 * Bp * H_in * H_out,
        transcendentals=Bp * H_out,
        bytes_accessed=(Bp * H_in * x_isz + H_in * H_out * w_isz
                        + H_out * 4 + Bp * H_out * o_isz),
    )

    if n_k == 1:
        # Single-K-block fast path (typical CLS-head shapes).
        out = pl.pallas_call(
            _mlp_kernel_single_k,
            out_shape=jax.ShapeDtypeStruct((Bp, H_out), out_dtype),
            grid_spec=pltpu.PrefetchScalarGridSpec(
                num_scalar_prefetch=0,
                grid=(n_m, n_n),
                in_specs=[
                    pl.BlockSpec((tm, H_in), lambda i, j: (i, 0)),   # x  [B, H_in]
                    pl.BlockSpec((H_in, tn), lambda i, j: (0, j)),   # Wt [H_in, H_out]
                    pl.BlockSpec((1, tn), lambda i, j: (0, j)),      # b  [1, H_out]
                ],
                out_specs=pl.BlockSpec((tm, tn), lambda i, j: (i, j)),
            ),
            compiler_params=pltpu.CompilerParams(
                dimension_semantics=("parallel", "parallel"),
                vmem_limit_bytes=vmem_limit,
            ),
            cost_estimate=cost,
        )(x, w_t, bias2)
    else:
        out = pl.pallas_call(
            _mlp_kernel_acc,
            out_shape=jax.ShapeDtypeStruct((Bp, H_out), out_dtype),
            grid_spec=pltpu.PrefetchScalarGridSpec(
                num_scalar_prefetch=0,
                grid=(n_m, n_n, n_k),
                in_specs=[
                    pl.BlockSpec((tm, tk), lambda i, j, k: (i, k)),  # x  [B, H_in]
                    pl.BlockSpec((tk, tn), lambda i, j, k: (k, j)),  # Wt [H_in, H_out]
                    pl.BlockSpec((1, tn), lambda i, j, k: (0, j)),   # b  [1, H_out]
                ],
                out_specs=pl.BlockSpec((tm, tn), lambda i, j, k: (i, j)),
                scratch_shapes=[pltpu.VMEM((tm, tn), jnp.float32)],  # f32 accumulator
            ),
            compiler_params=pltpu.CompilerParams(
                dimension_semantics=("parallel", "parallel", "arbitrary"),
                vmem_limit_bytes=vmem_limit,
            ),
            cost_estimate=cost,
        )(x, w_t, bias2)

    return out[:B] if Bp != B else out


# --------------------------------------------------------------------------- #
# Demo / self-test
# --------------------------------------------------------------------------- #
if __name__ == "__main__":
    key = jax.random.PRNGKey(0)
    k_x, k_w, k_b, k_x2 = jax.random.split(key, 4)

    # --- Shape 1: small CLS-head shape (single-K fast path, grid split on N) ---
    B1, H1 = 8, 256
    x1 = jax.random.normal(k_x, (B1, H1), dtype=jnp.float32)
    w1 = jax.random.normal(k_w, (H1, H1), dtype=jnp.float32) * 0.02  # PyTorch [out, in]
    b1 = jax.random.normal(k_b, (H1,), dtype=jnp.float32) * 0.02
    w1_t, b1_2 = prepare_mlp_params(w1, b1)          # one-time param prep
    out1 = jax.block_until_ready(mlp_layer(x1, w1_t, b1_2))
    ref1 = jnp.tanh(x1 @ w1.T + b1)
    assert out1.shape == (B1, H1)
    assert jnp.allclose(out1, ref1, atol=3e-2, rtol=3e-2), float(
        jnp.max(jnp.abs(out1 - ref1)))

    # --- Shape 2: bigger batch; also force K-tiling to exercise the acc path ---
    B2, H2 = 256, 512
    x2 = jax.random.normal(k_x2, (B2, H2), dtype=jnp.float32)
    w2 = jax.random.normal(k_w, (H2, H2), dtype=jnp.float32) * 0.02
    b2 = jax.random.normal(k_b, (H2,), dtype=jnp.float32) * 0.02
    w2_t, b2_2 = prepare_mlp_params(w2, b2)
    ref2 = jnp.tanh(x2 @ w2.T + b2)

    out2 = jax.block_until_ready(mlp_layer(x2, w2_t, b2_2))              # single-K path
    assert out2.shape == (B2, H2)
    assert jnp.allclose(out2, ref2, atol=3e-2, rtol=3e-2), float(
        jnp.max(jnp.abs(out2 - ref2)))

    out3 = jax.block_until_ready(mlp_layer(x2, w2_t, b2_2, max_tk=128))  # accumulator path
    assert jnp.allclose(out3, ref2, atol=3e-2, rtol=3e-2), float(
        jnp.max(jnp.abs(out3 - ref2)))

    print("KERNEL_OK")
</pallas_src>

<mosaic_0001>
module attributes {stable_mosaic.version = 11 : i64} {
  func.func @_mlp_kernel_single_k(%arg0: i32, %arg1: i32, %arg2: memref<8x256xf32, #tpu.memory_space<vmem>>, %arg3: memref<256x128xbf16, #tpu.memory_space<vmem>>, %arg4: memref<1x128xf32, #tpu.memory_space<vmem>>, %arg5: memref<8x128xf32, #tpu.memory_space<vmem>>) attributes {dimension_semantics = [#tpu.dimension_semantics<parallel>, #tpu.dimension_semantics<parallel>], iteration_bounds = array<i64: 1, 2>, scalar_prefetch = 0 : i64, scratch_operands = 0 : i64, tpu.core_type = #tpu.core_type<tc>, window_params = [{transform_indices = @transform_0, window_bounds = array<i64: 8, 256>}, {transform_indices = @transform_1, window_bounds = array<i64: 256, 128>}, {transform_indices = @transform_2, window_bounds = array<i64: 1, 128>}, {transform_indices = @transform_3, window_bounds = array<i64: 8, 128>}]} {
    %c0 = arith.constant 0 : index
    %c0_0 = arith.constant 0 : index
    %0 = vector.load %arg2[%c0, %c0_0] : memref<8x256xf32, #tpu.memory_space<vmem>>, vector<8x256xf32>
    %1 = arith.truncf %0 : vector<8x256xf32> to vector<8x256xbf16>
    %c0_1 = arith.constant 0 : index
    %c0_2 = arith.constant 0 : index
    %2 = vector.load %arg3[%c0_1, %c0_2] : memref<256x128xbf16, #tpu.memory_space<vmem>>, vector<256x128xbf16>
    %cst = arith.constant dense<0.000000e+00> : vector<8x128xf32>
    %3 = tpu.matmul %1, %2, %cst {dimension_numbers = #tpu.dot_dimension_numbers<[1], [0], [0], [1], [0, 0, 1, 1], [], []>} : vector<8x256xbf16>, vector<256x128xbf16>, vector<8x128xf32> -> vector<8x128xf32>
    %c0_3 = arith.constant 0 : index
    %c0_4 = arith.constant 0 : index
    %4 = vector.load %arg4[%c0_3, %c0_4] : memref<1x128xf32, #tpu.memory_space<vmem>>, vector<1x128xf32>
    %5 = vector.broadcast %4 : vector<1x128xf32> to vector<8x128xf32>
    %6 = arith.addf %3, %5 : vector<8x128xf32>
    %7 = math.tanh %6 : vector<8x128xf32>
    %c0_5 = arith.constant 0 : index
    %c0_6 = arith.constant 0 : index
    %8 = vector.load %arg5[%c0_5, %c0_6] : memref<8x128xf32, #tpu.memory_space<vmem>>, vector<8x128xf32>
    tpu.vector_store %arg5[%c0_5, %c0_6], %7 {strides = array<i32>} : memref<8x128xf32, #tpu.memory_space<vmem>>, vector<8x128xf32>,
    return
  }
  func.func @transform_0(%arg0: i32, %arg1: i32) -> (i32, i32) {
    %c0_i32 = arith.constant 0 : i32
    %c0_i32_0 = arith.constant 0 : i32
    return %arg0, %c0_i32 : i32, i32
  }
  func.func @transform_1(%arg0: i32, %arg1: i32) -> (i32, i32) {
    %c0_i32 = arith.constant 0 : i32
    %c0_i32_0 = arith.constant 0 : i32
    return %c0_i32, %arg1 : i32, i32
  }
  func.func @transform_2(%arg0: i32, %arg1: i32) -> (i32, i32) {
    %c0_i32 = arith.constant 0 : i32
    %c0_i32_0 = arith.constant 0 : i32
    return %c0_i32, %arg1 : i32, i32
  }
  func.func @transform_3(%arg0: i32, %arg1: i32) -> (i32, i32) {
    %c0_i32 = arith.constant 0 : i32
    return %arg0, %arg1 : i32, i32
  }
}

</mosaic_0001>

<llo_original>
// kernel: mlp_layer.1
$region0: #{mlp_layer.1}
  #allocation0 [shape = 'u32[]', space=smem, size = 0x4, offset = 0x4, fixed_abs, tag = 'smem constant byte address 0x4 - core index']
  #allocation1 [shape = 'u32[144,128]{1,0:T(1,128)}', space=vmem, size = 0x12000, scoped, tag = 'internal scratch']
  %s0 = inlined_call_operand.hbm [shape: f32[8,256], index: 0, kind: input, shape index: {}]
  %s1 = inlined_call_operand.hbm [shape: bf16[256,256], index: 1, kind: input, shape index: {}]
  %s2 = inlined_call_operand.vmem [shape: f32[1,256], index: 2, kind: input, shape index: {}]
  %s3 = inlined_call_operand.hbm [shape: f32[8,256], index: 3, kind: output, shape index: {}]
  %s4 = sld [smem:[#allocation0]]
  $region53: #{mlp_layer.1} parent=0
    _
  %s6 = ssub.s32 1, %s4
  %s7 = scalar_select 0, %s6, %s4
  $region1: #{mlp_layer.1} parent=0
    #allocation2 [shape = 'u8[8192]{0}', space=vmem, size = 0x2000, scoped, tag = 'input window, operand 0, single buffered']
    #allocation3 [shape = 's32[2]{0}', space=sflag, size = 0x8, scoped, tag = 'scoped memory for mlp_layer.1']
    #allocation4 [shape = 's32[2]{0}', space=sflag, size = 0x8, scoped, tag = 'scoped memory for mlp_layer.1']
    #allocation5 [shape = 'u8[131072]{0}', space=vmem, size = 0x20000, scoped, tag = 'input window, operand 1']
    #allocation6 [shape = 's32[2]{0}', space=sflag, size = 0x8, scoped, tag = 'scoped memory for mlp_layer.1']
    #allocation7 [shape = 'u8[8192]{0}', space=vmem, size = 0x2000, scoped, tag = 'output window, operand 0']
    %8 = vsyncpa [#allocation3], 0
    %9 = vsyncpa [#allocation6], 0
    %s10 = scalar_lea.sflag [#allocation6], 1
    %11 = vsyncpa %s10, 0
    %12 = vsyncpa [#allocation4], 0
    %s13 = scalar_lea.sflag [#allocation4], 1
    %14 = vsyncpa %s13, 0
    loop: start=0, step=1, limit=4
    $region2: #{mlp_layer.1} parent=1 // loop_pre_header
      _
    $region3: #{mlp_layer.1} parent=1 // loop_header
      %s16 = sphi 0, %s20
      %p17 = scmp.ge.s32.totalorder %s16, 4
      %s23 = sphi 0, %s35
      %s24 = sphi 0, %s31
      %s25 = sphi 0, %s23
      %s26 = sphi 0, %s24
      %s27 = sphi 0, %s25
      %s28 = sphi 0, %s26
      %s38 = sphi 0, %s40
      %s41 = sphi 0, %s38
      %s42 = sphi 0, %s41
      %s58 = sphi 0, %s42
      %s64 = sphi 0, %s66
      %s67 = sphi 0, %s64
      %s68 = sphi 0, %s67
      %s84 = sphi 0, %s68
      %s90 = sphi 0, %s92
      %s93 = sphi 0, %s90
      %s94 = sphi 0, %s93
      %s110 = sphi 0, %s94
      %s118 = sphi 0, %s120
      %s121 = sphi 0, %s118
      %s122 = sphi 0, %s121
      %s138 = sphi 0, %s122
    $region4: #{mlp_layer.1} parent=1 // loop_header_branch
      %19 = sbr.rel (%p17) target = $region8
    $region5: #{mlp_layer.1} parent=1 // loop_body
      %s21 = ssub.s32 %s16, 1
      %s22 = ssub.s32 %s16, 2
      %s29 = sadd.s32 1, %s24
      %p30 = scmp.ge.s32.totalorder %s29, 2
      %s31 = scalar_select %p30, 0, %s29
      %s32 = sadd.s32 1, %s23
      %s33 = scalar_select %p30, %s32, %s23
      %p34 = scmp.ge.s32.totalorder %s33, 1
      %s35 = scalar_select %p34, 0, %s33
      %s36 = ssub.s32 %s23, %s35
      %p37 = scmp.eq.s32.totalorder %s36, 0
      %s39 = sadd.s32 %s38, 1
      %s40 = scalar_select %p37, %s38, %s39
      %p43 = pneg %p37
      %p44 = scmp.eq.s32.totalorder %s16, 1
      %p45 = por %p43, %p44
      %p46 = scmp.ne.s32.totalorder %s38, %s41
      %p47 = scmp.eq.s32.totalorder %s16, 0
      %p48 = por %p46, %p47
      %p49 = scmp.ne.s32.totalorder %s38, %s41
      %p50 = scmp.eq.s32.totalorder %s21, 1
      %p51 = por %p49, %p50
      %p52 = scmp.ne.s32.totalorder %s41, %s42
      %p53 = scmp.eq.s32.totalorder %s21, 0
      %p54 = por %p52, %p53
      %p55 = scmp.ne.s32.totalorder %s41, %s42
      %p56 = scmp.eq.s32.totalorder %s22, 1
      %p57 = por %p55, %p56
      %p59 = scmp.ne.s32.totalorder %s42, %s58
      %p60 = scmp.eq.s32.totalorder %s22, 0
      %p61 = por %p59, %p60
      %s62 = ssub.s32 %s24, %s31
      %p63 = scmp.eq.s32.totalorder %s62, 0
      %s65 = sadd.s32 %s64, 1
      %s66 = scalar_select %p63, %s64, %s65
      %p69 = pneg %p63
      %p70 = scmp.eq.s32.totalorder %s16, 1
      %p71 = por %p69, %p70
      %p72 = scmp.ne.s32.totalorder %s64, %s67
      %p73 = scmp.eq.s32.totalorder %s16, 0
      %p74 = por %p72, %p73
      %p75 = scmp.ne.s32.totalorder %s64, %s67
      %p76 = scmp.eq.s32.totalorder %s21, 1
      %p77 = por %p75, %p76
      %p78 = scmp.ne.s32.totalorder %s67, %s68
      %p79 = scmp.eq.s32.totalorder %s21, 0
      %p80 = por %p78, %p79
      %p81 = scmp.ne.s32.totalorder %s67, %s68
      %p82 = scmp.eq.s32.totalorder %s22, 1
      %p83 = por %p81, %p82
      %p85 = scmp.ne.s32.totalorder %s68, %s84
      %p86 = scmp.eq.s32.totalorder %s22, 0
      %p87 = por %p85, %p86
      %s88 = ssub.s32 %s24, %s31
      %p89 = scmp.eq.s32.totalorder %s88, 0
      %s91 = sadd.s32 %s90, 1
      %s92 = scalar_select %p89, %s90, %s91
      %p95 = pneg %p89
      %p96 = scmp.eq.s32.totalorder %s16, 1
      %p97 = por %p95, %p96
      %p98 = scmp.ne.s32.totalorder %s90, %s93
      %p99 = scmp.eq.s32.totalorder %s16, 0
      %p100 = por %p98, %p99
      %p101 = scmp.ne.s32.totalorder %s90, %s93
      %p102 = scmp.eq.s32.totalorder %s21, 1
      %p103 = por %p101, %p102
      %p104 = scmp.ne.s32.totalorder %s93, %s94
      %p105 = scmp.eq.s32.totalorder %s21, 0
      %p106 = por %p104, %p105
      %p107 = scmp.ne.s32.totalorder %s93, %s94
      %p108 = scmp.eq.s32.totalorder %s22, 1
      %p109 = por %p107, %p108
      %p111 = scmp.ne.s32.totalorder %s94, %s110
      %p112 = scmp.eq.s32.totalorder %s22, 0
      %p113 = por %p111, %p112
      %s114 = ssub.s32 %s23, %s35
      %s115 = ssub.s32 %s24, %s31
      %s116 = sor.u32 %s114, %s115
      %p117 = scmp.eq.s32.totalorder %s116, 0
      %s119 = sadd.s32 %s118, 1
      %s120 = scalar_select %p117, %s118, %s119
      %p123 = pneg %p117
      %p124 = scmp.eq.s32.totalorder %s16, 1
      %p125 = por %p123, %p124
      %p126 = scmp.ne.s32.totalorder %s118, %s121
      %p127 = scmp.eq.s32.totalorder %s16, 0
      %p128 = por %p126, %p127
      %p129 = scmp.ne.s32.totalorder %s118, %s121
      %p130 = scmp.eq.s32.totalorder %s21, 1
      %p131 = por %p129, %p130
      %p132 = scmp.ne.s32.totalorder %s121, %s122
      %p133 = scmp.eq.s32.totalorder %s21, 0
      %p134 = por %p132, %p133
      %p135 = scmp.ne.s32.totalorder %s121, %s122
      %p136 = scmp.eq.s32.totalorder %s22, 1
      %p137 = por %p135, %p136
      %p139 = scmp.ne.s32.totalorder %s122, %s138
      %p140 = scmp.eq.s32.totalorder %s22, 0
      %p141 = por %p139, %p140
      %p142 = scmp.le.s32.totalorder 1, %s16
      %p143 = scmp.lt.s32.totalorder %s16, 3
      %p144 = pnand %p142, %p143
      %p145 = pneg %p144
      // Predicated region
      $region9: #{mlp_layer.1} parent=5 // pred_check
        _
      $region10: #{mlp_layer.1} parent=5 // pred_check_branch
        %147 = sbr.rel (%p144) target = $region12
      $region11: #{mlp_layer.1} parent=5 // pred_region
        %s148 = ssub.s32 %s16, 1
        // Predicated region
        $region13: #{mlp_layer.1} parent=11 // pred_check
          %p149 = pneg %p54
        $region14: #{mlp_layer.1} parent=11 // pred_check_branch
          %151 = sbr.rel (%p149) target = $region16
        $region15: #{mlp_layer.1} parent=11 // pred_region
          %s153 = ssub.s32 256, 256
          %154 = vsyncadd [#allocation3], %s153
          %s155 = smul.addr %s25, 2
          %s156 = smul.addr %s155, 128
          %s157 = scalar_lea.hbm %s0, %s156
          %s159 = sshll.u32 [#allocation2], 4
          %s160 = int_to_ptr.vmem [resolvable:$true] %s159
          %162 = dma.hbm_to_vmem [thread:$0]  %s157, 256, %s160, [#allocation3]
        $region16: #{mlp_layer.1} parent=11 // pred_fallthru
          _
      $region12: #{mlp_layer.1} parent=5 // pred_fallthru
        _
      %p163 = scmp.lt.s32.totalorder %s16, 2
      // Predicated region
      $region17: #{mlp_layer.1} parent=5 // pred_check
        %p164 = pneg %p163
      $region18: #{mlp_layer.1} parent=5 // pred_check_branch
        %166 = sbr.rel (%p164) target = $region20
      $region19: #{mlp_layer.1} parent=5 // pred_region
        // Predicated region
        $region21: #{mlp_layer.1} parent=19 // pred_check
          %p167 = pneg %p74
        $region22: #{mlp_layer.1} parent=19 // pred_check_branch
          %169 = sbr.rel (%p167) target = $region24
        $region23: #{mlp_layer.1} parent=19 // pred_region
          %s170 = sand.u32 %s64, 1
          %s171 = scalar_lea.sflag [#allocation6], %s170
          %s172 = sand.u32 %s64, 1
          %s173 = smul.addr %s172, 128
          %s174 = scalar_lea.vmem [#allocation5], %s173
          %s176 = ssub.s32 2048, 2048
          %177 = vsyncadd %s171, %s176
          %s178 = smul.addr %s24, 64
          %s179 = scalar_lea.hbm %s1, %s178
          %s180 = sshll.u32 %s174, 4
          %s181 = int_to_ptr.vmem [resolvable:$true] %s180
          %186 = dma.hbm_to_vmem [thread:$0]  %s179, 2048, %s181, %s171, 128, 64, 4
        $region24: #{mlp_layer.1} parent=19 // pred_fallthru
          _
        // Predicated region
        $region25: #{mlp_layer.1} parent=19 // pred_check
          %p187 = pneg %p100
        $region26: #{mlp_layer.1} parent=19 // pred_check_branch
          %189 = sbr.rel (%p187) target = $region28
        $region27: #{mlp_layer.1} parent=19 // pred_region
          %p190 = scmp.lt.s32.totalorder %s24, 1
          %s191 = scalar_select %p190, %s24, 1
          %s192 = scalar_lea.vmem %s2, %s191
        $region28: #{mlp_layer.1} parent=19 // pred_fallthru
          _
      $region20: #{mlp_layer.1} parent=5 // pred_fallthru
        _
      %p193 = scmp.le.s32.totalorder 1, %s16
      %p194 = scmp.lt.s32.totalorder %s16, 3
      %p195 = pnand %p193, %p194
      %p196 = pneg %p195
      // Predicated region
      $region29: #{mlp_layer.1} parent=5 // pred_check
        _
      $region30: #{mlp_layer.1} parent=5 // pred_check_branch
        %198 = sbr.rel (%p195) target = $region32
      $region31: #{mlp_layer.1} parent=5 // pred_region
        %s199 = ssub.s32 %s16, 1
        // Predicated region
        $region33: #{mlp_layer.1} parent=31 // pred_check
          %p200 = pneg %p54
        $region34: #{mlp_layer.1} parent=31 // pred_check_branch
          %202 = sbr.rel (%p200) target = $region36
        $region35: #{mlp_layer.1} parent=31 // pred_region
          %203 = dma.done [#allocation3], 256
        $region36: #{mlp_layer.1} parent=31 // pred_fallthru
          _
        %s204 = sand.u32 %s67, 1
        %s205 = scalar_lea.sflag [#allocation6], %s204
        %s206 = sand.u32 %s67, 1
        %s207 = smul.addr %s206, 128
        %s208 = scalar_lea.vmem [#allocation5], %s207
        // Predicated region
        $region37: #{mlp_layer.1} parent=31 // pred_check
          %p209 = pneg %p80
        $region38: #{mlp_layer.1} parent=31 // pred_check_branch
          %211 = sbr.rel (%p209) target = $region40
        $region39: #{mlp_layer.1} parent=31 // pred_region
          %212 = dma.done %s205, 2048
        $region40: #{mlp_layer.1} parent=31 // pred_fallthru
          _
        %p213 = pneg %p54
        %p214 = pneg %p51
        %s215 = sand.u32 %s67, 1
        %s216 = scalar_lea.sflag [#allocation6], %s215
        %s217 = sand.u32 %s67, 1
        %s218 = smul.addr %s217, 128
        %s219 = scalar_lea.vmem [#allocation5], %s218
        %p220 = pneg %p80
        %p221 = pneg %p77
        %p222 = scmp.lt.s32.totalorder %s26, 1
        %s223 = scalar_select %p222, %s26, 1
        %s224 = scalar_lea.vmem %s2, %s223
        %p225 = pneg %p106
        %p226 = pneg %p103
        %p227 = pneg %p134
        %p228 = pneg %p131
        %s229 = sand.u32 %s121, 1
        %s230 = scalar_lea.sflag [#allocation4], %s229
        %s231 = sand.u32 %s121, 1
        %s232 = smul.addr %s231, 8
        %s233 = scalar_lea.vmem [#allocation7], %s232
        %p234 = scmp.lt.s32.totalorder %s26, 1
        %s235 = scalar_select %p234, %s26, 1
        %s236 = scalar_lea.vmem %s2, %s235
        %v238 = vld [vmem:[#allocation2] sm:$0xff]
        %v239 = vld [vmem:[#allocation2 + $0x8] sm:$0xff]
        %v240 = vpack.c.bf16 %v238, %v238
        %v241 = vpack.c.bf16 %v239, %v239
        %v242 = vld [vmem:[%s208] sm:$0xf]
        %v243 = vld [vmem:[%s208 + $0x4] sm:$0xf]
        %v244 = vld [vmem:[%s208 + $0x8] sm:$0xf]
        %v245 = vld [vmem:[%s208 + $0xc] sm:$0xf]
        %v246 = vld [vmem:[%s208 + $0x10] sm:$0xf]
        %v247 = vld [vmem:[%s208 + $0x14] sm:$0xf]
        %v248 = vld [vmem:[%s208 + $0x18] sm:$0xf]
        %v249 = vld [vmem:[%s208 + $0x1c] sm:$0xf]
        %v250 = vld [vmem:[%s208 + $0x20] sm:$0xf]
        %v251 = vld [vmem:[%s208 + $0x24] sm:$0xf]
        %v252 = vld [vmem:[%s208 + $0x28] sm:$0xf]
        %v253 = vld [vmem:[%s208 + $0x2c] sm:$0xf]
        %v254 = vld [vmem:[%s208 + $0x30] sm:$0xf]
        %v255 = vld [vmem:[%s208 + $0x34] sm:$0xf]
        %v256 = vld [vmem:[%s208 + $0x38] sm:$0xf]
        %v257 = vld [vmem:[%s208 + $0x3c] sm:$0xf]
        %v258 = vld [vmem:[%s208 + $0x40] sm:$0xf]
        %v259 = vld [vmem:[%s208 + $0x44] sm:$0xf]
        %v260 = vld [vmem:[%s208 + $0x48] sm:$0xf]
        %v261 = vld [vmem:[%s208 + $0x4c] sm:$0xf]
        %v262 = vld [vmem:[%s208 + $0x50] sm:$0xf]
        %v263 = vld [vmem:[%s208 + $0x54] sm:$0xf]
        %v264 = vld [vmem:[%s208 + $0x58] sm:$0xf]
        %v265 = vld [vmem:[%s208 + $0x5c] sm:$0xf]
        %v266 = vld [vmem:[%s208 + $0x60] sm:$0xf]
        %v267 = vld [vmem:[%s208 + $0x64] sm:$0xf]
        %v268 = vld [vmem:[%s208 + $0x68] sm:$0xf]
        %v269 = vld [vmem:[%s208 + $0x6c] sm:$0xf]
        %v270 = vld [vmem:[%s208 + $0x70] sm:$0xf]
        %v271 = vld [vmem:[%s208 + $0x74] sm:$0xf]
        %v272 = vld [vmem:[%s208 + $0x78] sm:$0xf]
        %v273 = vld [vmem:[%s208 + $0x7c] sm:$0xf]
        %v274 = vld [vmem:[%s236] sm:$0x1]
        %v276 = vlaneseq
        %v277 = vshrl.u32 %v276, 7
        %v278 = vsub.s32 0, %v277
        %v279 = vrot.slane %v274, %v278
        %v313 = vunpack.c.l.b16 %v242
        %v314 = vunpack.c.l.b16 %v243
        %v315 = vunpack.c.l.b16 %v244
        %v316 = vunpack.c.l.b16 %v245
        %v317 = vunpack.c.l.b16 %v246
        %v318 = vunpack.c.l.b16 %v247
        %v319 = vunpack.c.l.b16 %v248
        %v320 = vunpack.c.l.b16 %v249
        %v321 = vunpack.c.l.b16 %v250
        %v322 = vunpack.c.l.b16 %v251
        %v323 = vunpack.c.l.b16 %v252
        %v324 = vunpack.c.l.b16 %v253
        %v325 = vunpack.c.l.b16 %v254
        %v326 = vunpack.c.l.b16 %v255
        %v327 = vunpack.c.l.b16 %v256
        %v328 = vunpack.c.l.b16 %v257
        %v329 = vunpack.c.l.b16 %v258
        %v330 = vunpack.c.l.b16 %v259
        %v331 = vunpack.c.l.b16 %v260
        %v332 = vunpack.c.l.b16 %v261
        %v333 = vunpack.c.l.b16 %v262
        %v334 = vunpack.c.l.b16 %v263
        %v335 = vunpack.c.l.b16 %v264
        %v336 = vunpack.c.l.b16 %v265
        %v337 = vunpack.c.l.b16 %v266
        %v338 = vunpack.c.l.b16 %v267
        %v339 = vunpack.c.l.b16 %v268
        %v340 = vunpack.c.l.b16 %v269
        %v341 = vunpack.c.l.b16 %v270
        %v342 = vunpack.c.l.b16 %v271
        %v343 = vunpack.c.l.b16 %v272
        %v344 = vunpack.c.l.b16 %v273
        %v345 = vpack.c.b16 %v314, %v313
        %v346 = vpack.c.b16 %v316, %v315
        %v347 = vpack.c.b16 %v318, %v317
        %v348 = vpack.c.b16 %v320, %v319
        %v349 = vpack.c.b16 %v322, %v321
        %v350 = vpack.c.b16 %v324, %v323
        %v351 = vpack.c.b16 %v326, %v325
        %v352 = vpack.c.b16 %v328, %v327
        %v353 = vpack.c.b16 %v330, %v329
        %v354 = vpack.c.b16 %v332, %v331
        %v355 = vpack.c.b16 %v334, %v333
        %v356 = vpack.c.b16 %v336, %v335
        %v357 = vpack.c.b16 %v338, %v337
        %v358 = vpack.c.b16 %v340, %v339
        %v359 = vpack.c.b16 %v342, %v341
        %v360 = vpack.c.b16 %v344, %v343
        %377 = vmatprep.subr.bf16.mxu0 0
        %378 = vmatpush1.bf16.msra.mxu0 %v352
        %379 = vmatprep.subr.bf16.mxu0 0
        %380 = vmatpush1.bf16.msra.mxu0 %v351
        %381 = vmatprep.subr.bf16.mxu0 0
        %382 = vmatpush1.bf16.msra.mxu0 %v350
        %383 = vmatprep.subr.bf16.mxu0 0
        %384 = vmatpush1.bf16.msra.mxu0 %v349
        %385 = vmatprep.subr.bf16.mxu0 0
        %386 = vmatpush1.bf16.msra.mxu0 %v348
        %387 = vmatprep.subr.bf16.mxu0 0
        %388 = vmatpush1.bf16.msra.mxu0 %v347
        %389 = vmatprep.subr.bf16.mxu0 0
        %390 = vmatpush1.bf16.msra.mxu0 %v346
        %391 = vmatprep.subr.bf16.mxu0 0
        %392 = vmatpush1.bf16.msra.mxu0 %v345
        %393 = vmatprep.subr.bf16.mxu0 0
        %394 = vmatpush2.bf16.msra.mxu0 %v360
        %395 = vmatprep.subr.bf16.mxu0 0
        %396 = vmatpush2.bf16.msra.mxu0 %v359
        %397 = vmatprep.subr.bf16.mxu0 0
        %398 = vmatpush2.bf16.msra.mxu0 %v358
        %399 = vmatprep.subr.bf16.mxu0 0
        %400 = vmatpush2.bf16.msra.mxu0 %v357
        %401 = vmatprep.subr.bf16.mxu0 0
        %402 = vmatpush2.bf16.msra.mxu0 %v356
        %403 = vmatprep.subr.bf16.mxu0 0
        %404 = vmatpush2.bf16.msra.mxu0 %v355
        %405 = vmatprep.subr.bf16.mxu0 0
        %406 = vmatpush2.bf16.msra.mxu0 %v354
        %407 = vmatprep.subr.bf16.mxu0 0
        %408 = vmatpush2.bf16.msra.mxu0 %v353
        %409 = vmatprep.mubr.bf16.mxu0 %v241
        %410 = vmatmul.mubr.bf16.gmra.mxu0 %v240
        %v411 = vpop.f32.mrf.mxu0
        %v412 = vadd.f32 %v279, %v411
        %v413 = vpop.f32.mrf.mxu0
        %v414 = vpop.f32.mrf.mxu0
        %v415 = vpop.f32.mrf.mxu0
        %416 = vdwg.mxu0
        %v417 = vtanh.pop %v412
        %418 = vst [vmem:[%s233] sm:$0xff] %v417
        %s419 = sand.u32 %s121, 1
        %s420 = scalar_lea.sflag [#allocation4], %s419
        %s421 = sand.u32 %s121, 1
        %s422 = smul.addr %s421, 8
        %s423 = scalar_lea.vmem [#allocation7], %s422
        // Predicated region
        $region41: #{mlp_layer.1} parent=31 // pred_check
          %p424 = pneg %p131
        $region42: #{mlp_layer.1} parent=31 // pred_check_branch
          %426 = sbr.rel (%p424) target = $region44
        $region43: #{mlp_layer.1} parent=31 // pred_region
          %s428 = ssub.s32 128, 128
          %429 = vsyncadd %s420, %s428
          %s430 = smul.addr %s25, 2
          %s431 = sadd.s32 %s26, %s430
          %s432 = smul.addr %s431, 128
          %s433 = scalar_lea.hbm %s3, %s432
          %s435 = sshll.u32 %s423, 4
          %s436 = int_to_ptr.vmem [resolvable:$true] %s435
          %438 = dma.vmem_to_hbm [thread:$0]  %s436, 128, %s433, %s420
        $region44: #{mlp_layer.1} parent=31 // pred_fallthru
          _
      $region32: #{mlp_layer.1} parent=5 // pred_fallthru
        _
      %p439 = scmp.le.s32.totalorder 2, %s16
      // Predicated region
      $region45: #{mlp_layer.1} parent=5 // pred_check
        %p440 = pneg %p439
      $region46: #{mlp_layer.1} parent=5 // pred_check_branch
        %442 = sbr.rel (%p440) target = $region48
      $region47: #{mlp_layer.1} parent=5 // pred_region
        %s443 = ssub.s32 %s16, 2
        // Predicated region
        $region49: #{mlp_layer.1} parent=47 // pred_check
          %p444 = pneg %p137
        $region50: #{mlp_layer.1} parent=47 // pred_check_branch
          %446 = sbr.rel (%p444) target = $region52
        $region51: #{mlp_layer.1} parent=47 // pred_region
          %s447 = sand.u32 %s122, 1
          %s448 = scalar_lea.sflag [#allocation4], %s447
          %s449 = sand.u32 %s122, 1
          %s450 = smul.addr %s449, 8
          %s451 = scalar_lea.vmem [#allocation7], %s450
          %452 = dma.done %s448, 128
        $region52: #{mlp_layer.1} parent=47 // pred_fallthru
          _
      $region48: #{mlp_layer.1} parent=5 // pred_fallthru
        _
    $region6: #{mlp_layer.1} parent=1 // loop_footer
      %s20 = sadd.s32 1, %s16
    $region7: #{mlp_layer.1} parent=1 // loop_footer_branch
      %15 = sbr.rel target = $region3
    $region8: #{mlp_layer.1} parent=1 // loop_exit
      _
    %453 = vsyncpa [#allocation3], 1
    %s454 = scalar_lea.sflag [#allocation3], 1
    %455 = vsyncpa %s454, 1
    %456 = vsyncpa [#allocation6], 1
    %s457 = scalar_lea.sflag [#allocation6], 1
    %458 = vsyncpa %s457, 1
    %459 = vsyncpa [#allocation4], 1
    %s460 = scalar_lea.sflag [#allocation4], 1
    %461 = vsyncpa %s460, 1

</llo_original>
